<compile_context>
chip_gen: v5e
topology: v5e:2x2
jax: 0.10.0
libtpu: 0.0.40
codegen_flags: <defaults>
</compile_context>

<pallas_src>
import functools

import jax
import jax.numpy as jnp
from jax.experimental import pallas as pl
from jax.experimental.pallas import tpu as pltpu


# ---------------------------------------------------------------------------
# Epilogue shared by all kernel variants: BN shift + PReLU [+ residual].
# ---------------------------------------------------------------------------
def _epilogue(y_f32, sa, res=None):
    y = y_f32 + sa[0:1, :]                       # BN (eval): scale folded into W
    y = jnp.where(y > 0, y, sa[1:2, :] * y)      # PReLU (per-channel alpha)
    # Dropout3d: eval mode -> identity.
    if res is not None:
        y = y + res                              # residual add
    return y


# ---------------------------------------------------------------------------
# Single-K-tile kernels: grid = (m, n), no accumulator scratch.
# ---------------------------------------------------------------------------
def _convblock_single_k_kernel(x_ref, w_ref, sa_ref, o_ref):
    y = jnp.dot(x_ref[...], w_ref[...], preferred_element_type=jnp.float32)
    o_ref[...] = _epilogue(y, sa_ref[...]).astype(o_ref.dtype)


def _convblock_single_k_residual_kernel(x_ref, w_ref, sa_ref, res_ref, o_ref):
    y = jnp.dot(x_ref[...], w_ref[...], preferred_element_type=jnp.float32)
    o_ref[...] = _epilogue(y, sa_ref[...], res_ref[...]).astype(o_ref.dtype)


# ---------------------------------------------------------------------------
# Multi-K-tile kernels: grid = (m, n, k); k is the reduction axis (last).
# ---------------------------------------------------------------------------
def _convblock_multi_k_kernel(x_ref, w_ref, sa_ref, o_ref, acc_ref):
    @pl.when(pl.program_id(2) == 0)
    def _():
        acc_ref[...] = jnp.zeros_like(acc_ref)

    acc_ref[...] += jnp.dot(x_ref[...], w_ref[...],
                            preferred_element_type=jnp.float32)

    @pl.when(pl.program_id(2) == pl.num_programs(2) - 1)
    def _():
        o_ref[...] = _epilogue(acc_ref[...], sa_ref[...]).astype(o_ref.dtype)


def _convblock_multi_k_residual_kernel(x_ref, w_ref, sa_ref, res_ref, o_ref,
                                       acc_ref):
    @pl.when(pl.program_id(2) == 0)
    def _():
        acc_ref[...] = jnp.zeros_like(acc_ref)

    acc_ref[...] += jnp.dot(x_ref[...], w_ref[...],
                            preferred_element_type=jnp.float32)

    @pl.when(pl.program_id(2) == pl.num_programs(2) - 1)
    def _():
        o_ref[...] = _epilogue(acc_ref[...], sa_ref[...],
                               res_ref[...]).astype(o_ref.dtype)


def _round_up(x, m):
    return ((x + m - 1) // m) * m


# ---------------------------------------------------------------------------
# Wrapper: im2col glue + pallas_call
# ---------------------------------------------------------------------------
def conv_block_forward(x, params, *, kernel=(1, 1), stride=(1, 1),
                       padding=(0, 0), groups=1, residual=False,
                       eps=1e-5, tm=512, compute_dtype=jnp.bfloat16):
    """Forward pass of ConvBlock in eval mode. x is NCHW float32."""
    assert groups == 1  # TODO(synk): grouped convolution not implemented.
    # TODO(synk): Dropout3d training-mode channel masking omitted (eval = identity).

    w = params["conv_w"]                    # (out_c, in_c, kh, kw)
    gamma = params["bn_gamma"]
    beta = params["bn_beta"]
    mean = params["bn_mean"]
    var = params["bn_var"]
    alpha = params["prelu_alpha"]

    N, C, H, W = x.shape
    out_c, in_c, kh, kw = w.shape
    assert in_c == C
    sh, sw = stride
    ph, pw = padding
    H_out = (H + 2 * ph - kh) // sh + 1
    W_out = (W + 2 * pw - kw) // sw + 1
    M = N * H_out * W_out
    K = C * kh * kw

    # --- im2col (glue, plain JAX; fuses with the bf16 cast below) -----------
    if (kh, kw) == (1, 1) and (sh, sw) == (1, 1) and (ph, pw) == (0, 0):
        # Pointwise conv: no im2col inflation, just an NCHW->NHWC view.
        x_mat = x.transpose(0, 2, 3, 1).reshape(M, K)
    else:
        # TODO(synk): replace materialized im2col with in-kernel tap accumulation
        # (shifted index_maps + accumulator) to avoid kh*kw x HBM inflation.
        xp = jnp.pad(x, ((0, 0), (0, 0), (ph, ph), (pw, pw)))
        patches = [xp[:, :, i:i + sh * H_out:sh, j:j + sw * W_out:sw]
                   for i in range(kh) for j in range(kw)]
        # (N, C, kh*kw, Ho, Wo) -> (N, C*kh*kw, Ho, Wo): matches OIHW flatten.
        cols = jnp.stack(patches, axis=2).reshape(N, C * kh * kw, H_out, W_out)
        x_mat = cols.transpose(0, 2, 3, 1).reshape(M, K)

    # Fold BatchNorm (eval): scale goes into the weights, shift stays.
    inv_std = jax.lax.rsqrt(var + eps)
    scale = gamma * inv_std                              # (out_c,)
    shift = beta - mean * scale                          # (out_c,)
    w_mat = w.reshape(out_c, K).T * scale[None, :]       # (K, out_c), scale folded

    # --- lane-dense channel padding ------------------------------------------
    Cp = _round_up(out_c, 128)
    if Cp != out_c:
        w_mat = jnp.pad(w_mat, ((0, 0), (0, Cp - out_c)))
        shift = jnp.pad(shift, (0, Cp - out_c))
        alpha_p = jnp.pad(alpha, (0, Cp - out_c))
    else:
        alpha_p = alpha
    sa = jnp.stack([shift, alpha_p], axis=0).astype(jnp.float32)   # (2, Cp)

    # --- K tiling (only pad/tile K when it is large) --------------------------
    MAX_SINGLE_TK = 4096
    if K <= MAX_SINGLE_TK:
        tk, Kp = K, K                       # single K tile: block == full dim
    else:
        tk = 512
        Kp = _round_up(K, tk)
        x_mat = jnp.pad(x_mat, ((0, 0), (0, Kp - K)))
        w_mat = jnp.pad(w_mat, ((0, Kp - K), (0, 0)))
    k_tiles = Kp // tk

    # bf16 operands for the MXU; accumulation stays f32 inside the kernel.
    x_mat = x_mat.astype(compute_dtype)
    w_mat = w_mat.astype(compute_dtype)

    # --- tile sizes ------------------------------------------------------------
    assert tm % 8 == 0
    tm_eff = tm if M >= tm else M           # full-dim block when M is small
    tn = 256 if Cp % 256 == 0 else 128

    # --- residual operand -------------------------------------------------------
    res_args = []
    if residual:
        assert (out_c, H_out, W_out) == (C, H, W), "residual needs matching shapes"
        res_mat = x.transpose(0, 2, 3, 1).reshape(M, C).astype(jnp.float32)
        if Cp != out_c:
            res_mat = jnp.pad(res_mat, ((0, 0), (0, Cp - out_c)))
        res_args = [res_mat]

    m_tiles = pl.cdiv(M, tm_eff)
    n_tiles = Cp // tn

    if k_tiles == 1:
        # Fast path: no reduction axis, no accumulator scratch, single pass.
        in_specs = [
            pl.BlockSpec((tm_eff, tk), lambda i, j: (i, 0)),
            pl.BlockSpec((tk, tn), lambda i, j: (0, j)),
            pl.BlockSpec((2, tn), lambda i, j: (0, j)),
        ]
        if residual:
            in_specs.append(pl.BlockSpec((tm_eff, tn), lambda i, j: (i, j)))
            kernel_fn = _convblock_single_k_residual_kernel
        else:
            kernel_fn = _convblock_single_k_kernel
        out_mat = pl.pallas_call(
            kernel_fn,
            out_shape=jax.ShapeDtypeStruct((M, Cp), x.dtype),
            grid=(m_tiles, n_tiles),
            in_specs=in_specs,
            out_specs=pl.BlockSpec((tm_eff, tn), lambda i, j: (i, j)),
            compiler_params=pltpu.CompilerParams(
                dimension_semantics=("parallel", "parallel"),
                vmem_limit_bytes=48 * 1024 * 1024,
            ),
        )(x_mat, w_mat, sa, *res_args)
    else:
        in_specs = [
            pl.BlockSpec((tm_eff, tk), lambda i, j, k: (i, k)),
            pl.BlockSpec((tk, tn), lambda i, j, k: (k, j)),
            pl.BlockSpec((2, tn), lambda i, j, k: (0, j)),
        ]
        if residual:
            in_specs.append(pl.BlockSpec((tm_eff, tn), lambda i, j, k: (i, j)))
            kernel_fn = _convblock_multi_k_residual_kernel
        else:
            kernel_fn = _convblock_multi_k_kernel
        out_mat = pl.pallas_call(
            kernel_fn,
            out_shape=jax.ShapeDtypeStruct((M, Cp), x.dtype),
            grid=(m_tiles, n_tiles, k_tiles),
            in_specs=in_specs,
            out_specs=pl.BlockSpec((tm_eff, tn), lambda i, j, k: (i, j)),
            scratch_shapes=[pltpu.VMEM((tm_eff, tn), jnp.float32)],
            compiler_params=pltpu.CompilerParams(
                dimension_semantics=("parallel", "parallel", "arbitrary"),
                vmem_limit_bytes=48 * 1024 * 1024,
            ),
        )(x_mat, w_mat, sa, *res_args)

    out = out_mat[:, :out_c].reshape(N, H_out, W_out, out_c).transpose(0, 3, 1, 2)
    return out


# ---------------------------------------------------------------------------
# Deterministic parameter init (shapes from ConvBlock.__init__)
# ---------------------------------------------------------------------------
def init_conv_block_params(key, in_c, out_c, kernel=(1, 1)):
    kh, kw = kernel
    k1, k2, k3, k4, k5 = jax.random.split(key, 5)
    fan_in = in_c * kh * kw
    return {
        "conv_w": jax.random.normal(k1, (out_c, in_c, kh, kw), jnp.float32)
                  / jnp.sqrt(float(fan_in)),
        "bn_gamma": 1.0 + 0.1 * jax.random.normal(k2, (out_c,), jnp.float32),
        "bn_beta": 0.1 * jax.random.normal(k3, (out_c,), jnp.float32),
        "bn_mean": 0.1 * jax.random.normal(k4, (out_c,), jnp.float32),
        "bn_var": 1.0 + 0.1 * jnp.abs(jax.random.normal(k5, (out_c,), jnp.float32)),
        "prelu_alpha": jnp.full((out_c,), 0.25, jnp.float32),  # PyTorch PReLU default
    }


# ---------------------------------------------------------------------------
# Pure-JAX reference (for correctness check)
# ---------------------------------------------------------------------------
def reference_forward(x, params, *, kernel, stride, padding, residual, eps=1e-5):
    y = jax.lax.conv_general_dilated(
        x, params["conv_w"], window_strides=stride,
        padding=[(padding[0], padding[0]), (padding[1], padding[1])],
        dimension_numbers=("NCHW", "OIHW", "NCHW"))
    inv_std = 1.0 / jnp.sqrt(params["bn_var"] + eps)
    scale = (params["bn_gamma"] * inv_std).reshape(1, -1, 1, 1)
    shift = (params["bn_beta"]
             - params["bn_mean"] * params["bn_gamma"] * inv_std).reshape(1, -1, 1, 1)
    y = y * scale + shift
    a = params["prelu_alpha"].reshape(1, -1, 1, 1)
    y = jnp.where(y > 0, y, a * y)
    if residual:
        y = y + x
    return y


if __name__ == "__main__":
    key = jax.random.PRNGKey(0)
    kx, kp1, kp2 = jax.random.split(key, 3)

    # Config 1: default ConvBlock (1x1 conv, no residual) -> single-K fast path.
    N, C_in, H, W, C_out = 2, 4, 16, 16, 8
    x = jax.random.normal(kx, (N, C_in, H, W), jnp.float32)
    params1 = init_conv_block_params(kp1, C_in, C_out, kernel=(1, 1))
    fwd1 = jax.jit(functools.partial(conv_block_forward, kernel=(1, 1),
                                     stride=(1, 1), padding=(0, 0),
                                     residual=False))
    out1 = fwd1(x, params1)
    jax.block_until_ready(out1)
    ref1 = reference_forward(x, params1, kernel=(1, 1), stride=(1, 1),
                             padding=(0, 0), residual=False)
    assert out1.shape == (N, C_out, H, W)
    # bf16 matmul operands -> slightly looser tolerance than pure f32.
    assert jnp.allclose(out1, ref1, atol=5e-2, rtol=5e-2)

    # Config 2: 3x3 conv, padding 1, residual=True (in_c == out_c).
    x2 = jax.random.normal(jax.random.fold_in(kx, 1), (N, C_out, H, W), jnp.float32)
    params2 = init_conv_block_params(kp2, C_out, C_out, kernel=(3, 3))
    fwd2 = jax.jit(functools.partial(conv_block_forward, kernel=(3, 3),
                                     stride=(1, 1), padding=(1, 1),
                                     residual=True))
    out2 = fwd2(x2, params2)
    jax.block_until_ready(out2)
    ref2 = reference_forward(x2, params2, kernel=(3, 3), stride=(1, 1),
                             padding=(1, 1), residual=True)
    assert out2.shape == (N, C_out, H, W)
    assert jnp.allclose(out2, ref2, atol=5e-2, rtol=5e-2)

    print("KERNEL_OK")
</pallas_src>

<mosaic_0001>
module attributes {stable_mosaic.version = 11 : i64} {
  func.func @_convblock_single_k_kernel(%arg0: i32, %arg1: i32, %arg2: memref<512x4xbf16, #tpu.memory_space<vmem>>, %arg3: memref<4x128xbf16, #tpu.memory_space<vmem>>, %arg4: memref<2x128xf32, #tpu.memory_space<vmem>>, %arg5: memref<512x128xf32, #tpu.memory_space<vmem>>) attributes {dimension_semantics = [#tpu.dimension_semantics<parallel>, #tpu.dimension_semantics<parallel>], iteration_bounds = array<i64: 1, 1>, scalar_prefetch = 0 : i64, scratch_operands = 0 : i64, tpu.core_type = #tpu.core_type<tc>, window_params = [{transform_indices = @transform_0, window_bounds = array<i64: 512, 4>}, {transform_indices = @transform_1, window_bounds = array<i64: 4, 128>}, {transform_indices = @transform_2, window_bounds = array<i64: 2, 128>}, {transform_indices = @transform_3, window_bounds = array<i64: 512, 128>}]} {
    %c0 = arith.constant 0 : index
    %c0_0 = arith.constant 0 : index
    %0 = vector.load %arg2[%c0, %c0_0] : memref<512x4xbf16, #tpu.memory_space<vmem>>, vector<512x4xbf16>
    %c0_1 = arith.constant 0 : index
    %c0_2 = arith.constant 0 : index
    %1 = vector.load %arg3[%c0_1, %c0_2] : memref<4x128xbf16, #tpu.memory_space<vmem>>, vector<4x128xbf16>
    %cst = arith.constant dense<0.000000e+00> : vector<512x128xf32>
    %2 = tpu.matmul %0, %1, %cst {dimension_numbers = #tpu.dot_dimension_numbers<[1], [0], [0], [1], [0, 0, 1, 1], [], []>} : vector<512x4xbf16>, vector<4x128xbf16>, vector<512x128xf32> -> vector<512x128xf32>
    %c0_3 = arith.constant 0 : index
    %c0_4 = arith.constant 0 : index
    %3 = vector.load %arg4[%c0_3, %c0_4] : memref<2x128xf32, #tpu.memory_space<vmem>>, vector<2x128xf32>
    %4 = vector.extract_strided_slice %3 {offsets = [0, 0], sizes = [1, 128], strides = [1, 1]} : vector<2x128xf32> to vector<1x128xf32>
    %5 = vector.broadcast %4 : vector<1x128xf32> to vector<512x128xf32>
    %6 = arith.addf %2, %5 : vector<512x128xf32>
    %cst_5 = arith.constant 0.000000e+00 : f32
    %7 = vector.broadcast %cst_5 : f32 to vector<512x128xf32>
    %8 = arith.cmpf ogt, %6, %7 : vector<512x128xf32>
    %9 = vector.extract_strided_slice %3 {offsets = [1, 0], sizes = [1, 128], strides = [1, 1]} : vector<2x128xf32> to vector<1x128xf32>
    %10 = vector.broadcast %9 : vector<1x128xf32> to vector<512x128xf32>
    %11 = arith.mulf %10, %6 : vector<512x128xf32>
    %12 = arith.select %8, %6, %11 : vector<512x128xi1>, vector<512x128xf32>
    %c0_6 = arith.constant 0 : index
    %c0_7 = arith.constant 0 : index
    %13 = vector.load %arg5[%c0_6, %c0_7] : memref<512x128xf32, #tpu.memory_space<vmem>>, vector<512x128xf32>
    tpu.vector_store %arg5[%c0_6, %c0_7], %12 {strides = array<i32>} : memref<512x128xf32, #tpu.memory_space<vmem>>, vector<512x128xf32>,
    return
  }
  func.func @transform_0(%arg0: i32, %arg1: i32) -> (i32, i32) {
    %c0_i32 = arith.constant 0 : i32
    %c0_i32_0 = arith.constant 0 : i32
    return %arg0, %c0_i32 : i32, i32
  }
  func.func @transform_1(%arg0: i32, %arg1: i32) -> (i32, i32) {
    %c0_i32 = arith.constant 0 : i32
    %c0_i32_0 = arith.constant 0 : i32
    return %c0_i32, %arg1 : i32, i32
  }
  func.func @transform_2(%arg0: i32, %arg1: i32) -> (i32, i32) {
    %c0_i32 = arith.constant 0 : i32
    %c0_i32_0 = arith.constant 0 : i32
    return %c0_i32, %arg1 : i32, i32
  }
  func.func @transform_3(%arg0: i32, %arg1: i32) -> (i32, i32) {
    %c0_i32 = arith.constant 0 : i32
    return %arg0, %arg1 : i32, i32
  }
}

</mosaic_0001>

<llo_original>
// kernel: conv_block_forward.1
$region0: #{conv_block_forward.1}
  #allocation0 [shape = 'u32[]', space=smem, size = 0x4, offset = 0x4, fixed_abs, tag = 'smem constant byte address 0x4 - core index']
  #allocation1 [shape = 'u32[72,128]{1,0:T(1,128)}', space=vmem, size = 0x9000, scoped, tag = 'internal scratch']
  %s0 = inlined_call_operand.vmem [shape: bf16[512,4], index: 0, kind: input, shape index: {}]
  %s1 = inlined_call_operand.vmem [shape: bf16[4,128], index: 1, kind: input, shape index: {}]
  %s2 = inlined_call_operand.vmem [shape: f32[2,128], index: 2, kind: input, shape index: {}]
  %s3 = inlined_call_operand.vmem [shape: f32[512,128], index: 3, kind: output, shape index: {}]
  %s4 = sld [smem:[#allocation0]]
  $region22: #{conv_block_forward.1} parent=0
    _
  %s6 = ssub.s32 1, %s4
  %s7 = scalar_select 0, %s6, %s4
  // Predicated region
  $region2: #{conv_block_forward.1} parent=0 // pred_check
    _
  $region3: #{conv_block_forward.1} parent=0 // pred_check_branch
    %9 = sbr.rel (0) target = $region5
  $region4: #{conv_block_forward.1} parent=0 // pred_region
    _
  $region5: #{conv_block_forward.1} parent=0 // pred_fallthru
    _
  // Predicated region
  $region6: #{conv_block_forward.1} parent=0 // pred_check
    _
  $region7: #{conv_block_forward.1} parent=0 // pred_check_branch
    %11 = sbr.rel (0) target = $region9
  $region8: #{conv_block_forward.1} parent=0 // pred_region
    _
  $region9: #{conv_block_forward.1} parent=0 // pred_fallthru
    _
  // Predicated region
  $region10: #{conv_block_forward.1} parent=0 // pred_check
    _
  $region11: #{conv_block_forward.1} parent=0 // pred_check_branch
    %13 = sbr.rel (0) target = $region13
  $region12: #{conv_block_forward.1} parent=0 // pred_region
    _
  $region13: #{conv_block_forward.1} parent=0 // pred_fallthru
    _
  %v15 = vld [vmem:[%s0] sm:$0xf]
  %v16 = vld [vmem:[%s0 + $0x4] sm:$0xf]
  %v17 = vld [vmem:[%s0 + $0x8] sm:$0xf]
  %v18 = vld [vmem:[%s0 + $0xc] sm:$0xf]
  %v19 = vld [vmem:[%s0 + $0x10] sm:$0xf]
  %v20 = vld [vmem:[%s0 + $0x14] sm:$0xf]
  %v21 = vld [vmem:[%s0 + $0x18] sm:$0xf]
  %v22 = vld [vmem:[%s0 + $0x1c] sm:$0xf]
  %v23 = vld [vmem:[%s0 + $0x20] sm:$0xf]
  %v24 = vld [vmem:[%s0 + $0x24] sm:$0xf]
  %v25 = vld [vmem:[%s0 + $0x28] sm:$0xf]
  %v26 = vld [vmem:[%s0 + $0x2c] sm:$0xf]
  %v27 = vld [vmem:[%s0 + $0x30] sm:$0xf]
  %v28 = vld [vmem:[%s0 + $0x34] sm:$0xf]
  %v29 = vld [vmem:[%s0 + $0x38] sm:$0xf]
  %v30 = vld [vmem:[%s0 + $0x3c] sm:$0xf]
  %v31 = vld [vmem:[%s0 + $0x40] sm:$0xf]
  %v32 = vld [vmem:[%s0 + $0x44] sm:$0xf]
  %v33 = vld [vmem:[%s0 + $0x48] sm:$0xf]
  %v34 = vld [vmem:[%s0 + $0x4c] sm:$0xf]
  %v35 = vld [vmem:[%s0 + $0x50] sm:$0xf]
  %v36 = vld [vmem:[%s0 + $0x54] sm:$0xf]
  %v37 = vld [vmem:[%s0 + $0x58] sm:$0xf]
  %v38 = vld [vmem:[%s0 + $0x5c] sm:$0xf]
  %v39 = vld [vmem:[%s0 + $0x60] sm:$0xf]
  %v40 = vld [vmem:[%s0 + $0x64] sm:$0xf]
  %v41 = vld [vmem:[%s0 + $0x68] sm:$0xf]
  %v42 = vld [vmem:[%s0 + $0x6c] sm:$0xf]
  %v43 = vld [vmem:[%s0 + $0x70] sm:$0xf]
  %v44 = vld [vmem:[%s0 + $0x74] sm:$0xf]
  %v45 = vld [vmem:[%s0 + $0x78] sm:$0xf]
  %v46 = vld [vmem:[%s0 + $0x7c] sm:$0xf]
  %v47 = vld [vmem:[%s0 + $0x80] sm:$0xf]
  %v48 = vld [vmem:[%s0 + $0x84] sm:$0xf]
  %v49 = vld [vmem:[%s0 + $0x88] sm:$0xf]
  %v50 = vld [vmem:[%s0 + $0x8c] sm:$0xf]
  %v51 = vld [vmem:[%s0 + $0x90] sm:$0xf]
  %v52 = vld [vmem:[%s0 + $0x94] sm:$0xf]
  %v53 = vld [vmem:[%s0 + $0x98] sm:$0xf]
  %v54 = vld [vmem:[%s0 + $0x9c] sm:$0xf]
  %v55 = vld [vmem:[%s0 + $0xa0] sm:$0xf]
  %v56 = vld [vmem:[%s0 + $0xa4] sm:$0xf]
  %v57 = vld [vmem:[%s0 + $0xa8] sm:$0xf]
  %v58 = vld [vmem:[%s0 + $0xac] sm:$0xf]
  %v59 = vld [vmem:[%s0 + $0xb0] sm:$0xf]
  %v60 = vld [vmem:[%s0 + $0xb4] sm:$0xf]
  %v61 = vld [vmem:[%s0 + $0xb8] sm:$0xf]
  %v62 = vld [vmem:[%s0 + $0xbc] sm:$0xf]
  %v63 = vld [vmem:[%s0 + $0xc0] sm:$0xf]
  %v64 = vld [vmem:[%s0 + $0xc4] sm:$0xf]
  %v65 = vld [vmem:[%s0 + $0xc8] sm:$0xf]
  %v66 = vld [vmem:[%s0 + $0xcc] sm:$0xf]
  %v67 = vld [vmem:[%s0 + $0xd0] sm:$0xf]
  %v68 = vld [vmem:[%s0 + $0xd4] sm:$0xf]
  %v69 = vld [vmem:[%s0 + $0xd8] sm:$0xf]
  %v70 = vld [vmem:[%s0 + $0xdc] sm:$0xf]
  %v71 = vld [vmem:[%s0 + $0xe0] sm:$0xf]
  %v72 = vld [vmem:[%s0 + $0xe4] sm:$0xf]
  %v73 = vld [vmem:[%s0 + $0xe8] sm:$0xf]
  %v74 = vld [vmem:[%s0 + $0xec] sm:$0xf]
  %v75 = vld [vmem:[%s0 + $0xf0] sm:$0xf]
  %v76 = vld [vmem:[%s0 + $0xf4] sm:$0xf]
  %v77 = vld [vmem:[%s0 + $0xf8] sm:$0xf]
  %v78 = vld [vmem:[%s0 + $0xfc] sm:$0xf]
  %v79 = vld [vmem:[%s1] sm:$0x3]
  %v80 = vld [vmem:[%s2] sm:$0x3]
  %v81 = vperm.slane %v80, 0
  %v146 = vunpack.c.l.b16 %v15
  %v147 = vunpack.c.l.b16 %v16
  %v148 = vunpack.c.l.b16 %v17
  %v149 = vunpack.c.l.b16 %v18
  %v150 = vunpack.c.l.b16 %v19
  %v151 = vunpack.c.l.b16 %v20
  %v152 = vunpack.c.l.b16 %v21
  %v153 = vunpack.c.l.b16 %v22
  %v154 = vunpack.c.l.b16 %v23
  %v155 = vunpack.c.l.b16 %v24
  %v156 = vunpack.c.l.b16 %v25
  %v157 = vunpack.c.l.b16 %v26
  %v158 = vunpack.c.l.b16 %v27
  %v159 = vunpack.c.l.b16 %v28
  %v160 = vunpack.c.l.b16 %v29
  %v161 = vunpack.c.l.b16 %v30
  %v162 = vunpack.c.l.b16 %v31
  %v163 = vunpack.c.l.b16 %v32
  %v164 = vunpack.c.l.b16 %v33
  %v165 = vunpack.c.l.b16 %v34
  %v166 = vunpack.c.l.b16 %v35
  %v167 = vunpack.c.l.b16 %v36
  %v168 = vunpack.c.l.b16 %v37
  %v169 = vunpack.c.l.b16 %v38
  %v170 = vunpack.c.l.b16 %v39
  %v171 = vunpack.c.l.b16 %v40
  %v172 = vunpack.c.l.b16 %v41
  %v173 = vunpack.c.l.b16 %v42
  %v174 = vunpack.c.l.b16 %v43
  %v175 = vunpack.c.l.b16 %v44
  %v176 = vunpack.c.l.b16 %v45
  %v177 = vunpack.c.l.b16 %v46
  %v178 = vunpack.c.l.b16 %v47
  %v179 = vunpack.c.l.b16 %v48
  %v180 = vunpack.c.l.b16 %v49
  %v181 = vunpack.c.l.b16 %v50
  %v182 = vunpack.c.l.b16 %v51
  %v183 = vunpack.c.l.b16 %v52
  %v184 = vunpack.c.l.b16 %v53
  %v185 = vunpack.c.l.b16 %v54
  %v186 = vunpack.c.l.b16 %v55
  %v187 = vunpack.c.l.b16 %v56
  %v188 = vunpack.c.l.b16 %v57
  %v189 = vunpack.c.l.b16 %v58
  %v190 = vunpack.c.l.b16 %v59
  %v191 = vunpack.c.l.b16 %v60
  %v192 = vunpack.c.l.b16 %v61
  %v193 = vunpack.c.l.b16 %v62
  %v194 = vunpack.c.l.b16 %v63
  %v195 = vunpack.c.l.b16 %v64
  %v196 = vunpack.c.l.b16 %v65
  %v197 = vunpack.c.l.b16 %v66
  %v198 = vunpack.c.l.b16 %v67
  %v199 = vunpack.c.l.b16 %v68
  %v200 = vunpack.c.l.b16 %v69
  %v201 = vunpack.c.l.b16 %v70
  %v202 = vunpack.c.l.b16 %v71
  %v203 = vunpack.c.l.b16 %v72
  %v204 = vunpack.c.l.b16 %v73
  %v205 = vunpack.c.l.b16 %v74
  %v206 = vunpack.c.l.b16 %v75
  %v207 = vunpack.c.l.b16 %v76
  %v208 = vunpack.c.l.b16 %v77
  %v209 = vunpack.c.l.b16 %v78
  %v210 = vpack.c.b16 %v147, %v146
  %v211 = vpack.c.b16 %v149, %v148
  %v212 = vpack.c.b16 %v151, %v150
  %v213 = vpack.c.b16 %v153, %v152
  %v214 = vpack.c.b16 %v155, %v154
  %v215 = vpack.c.b16 %v157, %v156
  %v216 = vpack.c.b16 %v159, %v158
  %v217 = vpack.c.b16 %v161, %v160
  %v218 = vpack.c.b16 %v163, %v162
  %v219 = vpack.c.b16 %v165, %v164
  %v220 = vpack.c.b16 %v167, %v166
  %v221 = vpack.c.b16 %v169, %v168
  %v222 = vpack.c.b16 %v171, %v170
  %v223 = vpack.c.b16 %v173, %v172
  %v224 = vpack.c.b16 %v175, %v174
  %v225 = vpack.c.b16 %v177, %v176
  %v226 = vpack.c.b16 %v179, %v178
  %v227 = vpack.c.b16 %v181, %v180
  %v228 = vpack.c.b16 %v183, %v182
  %v229 = vpack.c.b16 %v185, %v184
  %v230 = vpack.c.b16 %v187, %v186
  %v231 = vpack.c.b16 %v189, %v188
  %v232 = vpack.c.b16 %v191, %v190
  %v233 = vpack.c.b16 %v193, %v192
  %v234 = vpack.c.b16 %v195, %v194
  %v235 = vpack.c.b16 %v197, %v196
  %v236 = vpack.c.b16 %v199, %v198
  %v237 = vpack.c.b16 %v201, %v200
  %v238 = vpack.c.b16 %v203, %v202
  %v239 = vpack.c.b16 %v205, %v204
  %v240 = vpack.c.b16 %v207, %v206
  %v241 = vpack.c.b16 %v209, %v208
  %vm242 = vcmask 31744
  %v244 = vsel %vm242, %v210, 0
  %v247 = vsel %vm242, %v211, 0
  %v250 = vsel %vm242, %v212, 0
  %v253 = vsel %vm242, %v213, 0
  %v256 = vsel %vm242, %v214, 0
  %v259 = vsel %vm242, %v215, 0
  %v262 = vsel %vm242, %v216, 0
  %v265 = vsel %vm242, %v217, 0
  %v268 = vsel %vm242, %v218, 0
  %v271 = vsel %vm242, %v219, 0
  %v274 = vsel %vm242, %v220, 0
  %v277 = vsel %vm242, %v221, 0
  %v280 = vsel %vm242, %v222, 0
  %v283 = vsel %vm242, %v223, 0
  %v286 = vsel %vm242, %v224, 0
  %v289 = vsel %vm242, %v225, 0
  %v292 = vsel %vm242, %v226, 0
  %v295 = vsel %vm242, %v227, 0
  %v298 = vsel %vm242, %v228, 0
  %v301 = vsel %vm242, %v229, 0
  %v304 = vsel %vm242, %v230, 0
  %v307 = vsel %vm242, %v231, 0
  %v310 = vsel %vm242, %v232, 0
  %v313 = vsel %vm242, %v233, 0
  %v316 = vsel %vm242, %v234, 0
  %v319 = vsel %vm242, %v235, 0
  %v322 = vsel %vm242, %v236, 0
  %v325 = vsel %vm242, %v237, 0
  %v328 = vsel %vm242, %v238, 0
  %v331 = vsel %vm242, %v239, 0
  %v334 = vsel %vm242, %v240, 0
  %v337 = vsel %vm242, %v241, 0
  %vm339 = vcmask 1041408
  %v341 = vsel %vm339, %v79, 0
  %343 = vmatpush.bf16.msra.mxu0 0
  %344 = vmatpush.bf16.msra.mxu0 0
  %345 = vmatpush.bf16.msra.mxu0 0
  %346 = vmatpush.bf16.msra.mxu0 0
  %347 = vmatpush.bf16.msra.mxu0 0
  %348 = vmatpush.bf16.msra.mxu0 0
  %349 = vmatpush.bf16.msra.mxu0 0
  %350 = vmatpush.bf16.msra.mxu0 %v341
  %351 = vmatmul.bf16.gmra.mxu0 %v244
  %v352 = vpop.f32.mrf.mxu0
  %v353 = vadd.f32 %v81, %v352
  %v354 = vpop.f32.mrf.mxu0
  %v355 = vadd.f32 %v81, %v354
  %356 = vmatmul.bf16.gmra.mxu0 %v247
  %v357 = vpop.f32.mrf.mxu0
  %v358 = vadd.f32 %v81, %v357
  %v359 = vpop.f32.mrf.mxu0
  %v360 = vadd.f32 %v81, %v359
  %361 = vmatmul.bf16.gmra.mxu0 %v250
  %v362 = vpop.f32.mrf.mxu0
  %v363 = vadd.f32 %v81, %v362
  %v364 = vpop.f32.mrf.mxu0
  %v365 = vadd.f32 %v81, %v364
  %366 = vmatmul.bf16.gmra.mxu0 %v253
  %v367 = vpop.f32.mrf.mxu0
  %v368 = vadd.f32 %v81, %v367
  %v369 = vpop.f32.mrf.mxu0
  %v370 = vadd.f32 %v81, %v369
  %371 = vmatmul.bf16.gmra.mxu0 %v256
  %v372 = vpop.f32.mrf.mxu0
  %v373 = vadd.f32 %v81, %v372
  %v374 = vpop.f32.mrf.mxu0
  %v375 = vadd.f32 %v81, %v374
  %376 = vmatmul.bf16.gmra.mxu0 %v259
  %v377 = vpop.f32.mrf.mxu0
  %v378 = vadd.f32 %v81, %v377
  %v379 = vpop.f32.mrf.mxu0
  %v380 = vadd.f32 %v81, %v379
  %381 = vmatmul.bf16.gmra.mxu0 %v262
  %v382 = vpop.f32.mrf.mxu0
  %v383 = vadd.f32 %v81, %v382
  %v384 = vpop.f32.mrf.mxu0
  %v385 = vadd.f32 %v81, %v384
  %386 = vmatmul.bf16.gmra.mxu0 %v265
  %v387 = vpop.f32.mrf.mxu0
  %v388 = vadd.f32 %v81, %v387
  %v389 = vpop.f32.mrf.mxu0
  %v390 = vadd.f32 %v81, %v389
  %391 = vmatmul.bf16.gmra.mxu0 %v268
  %v392 = vpop.f32.mrf.mxu0
  %v393 = vadd.f32 %v81, %v392
  %v394 = vpop.f32.mrf.mxu0
  %v395 = vadd.f32 %v81, %v394
  %396 = vmatmul.bf16.gmra.mxu0 %v271
  %v397 = vpop.f32.mrf.mxu0
  %v398 = vadd.f32 %v81, %v397
  %v399 = vpop.f32.mrf.mxu0
  %v400 = vadd.f32 %v81, %v399
  %401 = vmatmul.bf16.gmra.mxu0 %v274
  %v402 = vpop.f32.mrf.mxu0
  %v403 = vadd.f32 %v81, %v402
  %v404 = vpop.f32.mrf.mxu0
  %v405 = vadd.f32 %v81, %v404
  %406 = vmatmul.bf16.gmra.mxu0 %v277
  %v407 = vpop.f32.mrf.mxu0
  %v408 = vadd.f32 %v81, %v407
  %v409 = vpop.f32.mrf.mxu0
  %v410 = vadd.f32 %v81, %v409
  %411 = vmatmul.bf16.gmra.mxu0 %v280
  %v412 = vpop.f32.mrf.mxu0
  %v413 = vadd.f32 %v81, %v412
  %v414 = vpop.f32.mrf.mxu0
  %v415 = vadd.f32 %v81, %v414
  %416 = vmatmul.bf16.gmra.mxu0 %v283
  %v417 = vpop.f32.mrf.mxu0
  %v418 = vadd.f32 %v81, %v417
  %v419 = vpop.f32.mrf.mxu0
  %v420 = vadd.f32 %v81, %v419
  %421 = vmatmul.bf16.gmra.mxu0 %v286
  %v422 = vpop.f32.mrf.mxu0
  %v423 = vadd.f32 %v81, %v422
  %v424 = vpop.f32.mrf.mxu0
  %v425 = vadd.f32 %v81, %v424
  %426 = vmatmul.bf16.gmra.mxu0 %v289
  %v427 = vpop.f32.mrf.mxu0
  %v428 = vadd.f32 %v81, %v427
  %v429 = vpop.f32.mrf.mxu0
  %v430 = vadd.f32 %v81, %v429
  %431 = vmatmul.bf16.gmra.mxu0 %v292
  %v432 = vpop.f32.mrf.mxu0
  %v433 = vadd.f32 %v81, %v432
  %v434 = vpop.f32.mrf.mxu0
  %v435 = vadd.f32 %v81, %v434
  %436 = vmatmul.bf16.gmra.mxu0 %v295
  %v437 = vpop.f32.mrf.mxu0
  %v438 = vadd.f32 %v81, %v437
  %v439 = vpop.f32.mrf.mxu0
  %v440 = vadd.f32 %v81, %v439
  %441 = vmatmul.bf16.gmra.mxu0 %v298
  %v442 = vpop.f32.mrf.mxu0
  %v443 = vadd.f32 %v81, %v442
  %v444 = vpop.f32.mrf.mxu0
  %v445 = vadd.f32 %v81, %v444
  %446 = vmatmul.bf16.gmra.mxu0 %v301
  %v447 = vpop.f32.mrf.mxu0
  %v448 = vadd.f32 %v81, %v447
  %v449 = vpop.f32.mrf.mxu0
  %v450 = vadd.f32 %v81, %v449
  %451 = vmatmul.bf16.gmra.mxu0 %v304
  %v452 = vpop.f32.mrf.mxu0
  %v453 = vadd.f32 %v81, %v452
  %v454 = vpop.f32.mrf.mxu0
  %v455 = vadd.f32 %v81, %v454
  %456 = vmatmul.bf16.gmra.mxu0 %v307
  %v457 = vpop.f32.mrf.mxu0
  %v458 = vadd.f32 %v81, %v457
  %v459 = vpop.f32.mrf.mxu0
  %v460 = vadd.f32 %v81, %v459
  %461 = vmatmul.bf16.gmra.mxu0 %v310
  %v462 = vpop.f32.mrf.mxu0
  %v463 = vadd.f32 %v81, %v462
  %v464 = vpop.f32.mrf.mxu0
  %v465 = vadd.f32 %v81, %v464
  %466 = vmatmul.bf16.gmra.mxu0 %v313
  %v467 = vpop.f32.mrf.mxu0
  %v468 = vadd.f32 %v81, %v467
  %v469 = vpop.f32.mrf.mxu0
  %v470 = vadd.f32 %v81, %v469
  %471 = vmatmul.bf16.gmra.mxu0 %v316
  %v472 = vpop.f32.mrf.mxu0
  %v473 = vadd.f32 %v81, %v472
  %v474 = vpop.f32.mrf.mxu0
  %v475 = vadd.f32 %v81, %v474
  %476 = vmatmul.bf16.gmra.mxu0 %v319
  %v477 = vpop.f32.mrf.mxu0
  %v478 = vadd.f32 %v81, %v477
  %v479 = vpop.f32.mrf.mxu0
  %v480 = vadd.f32 %v81, %v479
  %481 = vmatmul.bf16.gmra.mxu0 %v322
  %v482 = vpop.f32.mrf.mxu0
  %v483 = vadd.f32 %v81, %v482
  %v484 = vpop.f32.mrf.mxu0
  %v485 = vadd.f32 %v81, %v484
  %486 = vmatmul.bf16.gmra.mxu0 %v325
  %v487 = vpop.f32.mrf.mxu0
  %v488 = vadd.f32 %v81, %v487
  %v489 = vpop.f32.mrf.mxu0
  %v490 = vadd.f32 %v81, %v489
  %491 = vmatmul.bf16.gmra.mxu0 %v328
  %v492 = vpop.f32.mrf.mxu0
  %v493 = vadd.f32 %v81, %v492
  %v494 = vpop.f32.mrf.mxu0
  %v495 = vadd.f32 %v81, %v494
  %496 = vmatmul.bf16.gmra.mxu0 %v331
  %v497 = vpop.f32.mrf.mxu0
  %v498 = vadd.f32 %v81, %v497
  %v499 = vpop.f32.mrf.mxu0
  %v500 = vadd.f32 %v81, %v499
  %501 = vmatmul.bf16.gmra.mxu0 %v334
  %v502 = vpop.f32.mrf.mxu0
  %v503 = vadd.f32 %v81, %v502
  %v504 = vpop.f32.mrf.mxu0
  %v505 = vadd.f32 %v81, %v504
  %506 = vmatmul.bf16.gmra.mxu0 %v337
  %v507 = vpop.f32.mrf.mxu0
  %v508 = vadd.f32 %v81, %v507
  %v509 = vpop.f32.mrf.mxu0
  %v510 = vadd.f32 %v81, %v509
  %511 = vdwg.mxu0
  %vm512 = vcmp.gt.f32.partialorder %v353, 0.0
  %vm513 = vcmp.gt.f32.partialorder %v355, 0.0
  %vm514 = vcmp.gt.f32.partialorder %v358, 0.0
  %vm515 = vcmp.gt.f32.partialorder %v360, 0.0
  %vm516 = vcmp.gt.f32.partialorder %v363, 0.0
  %vm517 = vcmp.gt.f32.partialorder %v365, 0.0
  %vm518 = vcmp.gt.f32.partialorder %v368, 0.0
  %vm519 = vcmp.gt.f32.partialorder %v370, 0.0
  %vm520 = vcmp.gt.f32.partialorder %v373, 0.0
  %vm521 = vcmp.gt.f32.partialorder %v375, 0.0
  %vm522 = vcmp.gt.f32.partialorder %v378, 0.0
  %vm523 = vcmp.gt.f32.partialorder %v380, 0.0
  %vm524 = vcmp.gt.f32.partialorder %v383, 0.0
  %vm525 = vcmp.gt.f32.partialorder %v385, 0.0
  %vm526 = vcmp.gt.f32.partialorder %v388, 0.0
  %vm527 = vcmp.gt.f32.partialorder %v390, 0.0
  %vm528 = vcmp.gt.f32.partialorder %v393, 0.0
  %vm529 = vcmp.gt.f32.partialorder %v395, 0.0
  %vm530 = vcmp.gt.f32.partialorder %v398, 0.0
  %vm531 = vcmp.gt.f32.partialorder %v400, 0.0
  %vm532 = vcmp.gt.f32.partialorder %v403, 0.0
  %vm533 = vcmp.gt.f32.partialorder %v405, 0.0
  %vm534 = vcmp.gt.f32.partialorder %v408, 0.0
  %vm535 = vcmp.gt.f32.partialorder %v410, 0.0
  %vm536 = vcmp.gt.f32.partialorder %v413, 0.0
  %vm537 = vcmp.gt.f32.partialorder %v415, 0.0
  %vm538 = vcmp.gt.f32.partialorder %v418, 0.0
  %vm539 = vcmp.gt.f32.partialorder %v420, 0.0
  %vm540 = vcmp.gt.f32.partialorder %v423, 0.0
  %vm541 = vcmp.gt.f32.partialorder %v425, 0.0
  %vm542 = vcmp.gt.f32.partialorder %v428, 0.0
  %vm543 = vcmp.gt.f32.partialorder %v430, 0.0
  %vm544 = vcmp.gt.f32.partialorder %v433, 0.0
  %vm545 = vcmp.gt.f32.partialorder %v435, 0.0
  %vm546 = vcmp.gt.f32.partialorder %v438, 0.0
  %vm547 = vcmp.gt.f32.partialorder %v440, 0.0
  %vm548 = vcmp.gt.f32.partialorder %v443, 0.0
  %vm549 = vcmp.gt.f32.partialorder %v445, 0.0
  %vm550 = vcmp.gt.f32.partialorder %v448, 0.0
  %vm551 = vcmp.gt.f32.partialorder %v450, 0.0
  %vm552 = vcmp.gt.f32.partialorder %v453, 0.0
  %vm553 = vcmp.gt.f32.partialorder %v455, 0.0
  %vm554 = vcmp.gt.f32.partialorder %v458, 0.0
  %vm555 = vcmp.gt.f32.partialorder %v460, 0.0
  %vm556 = vcmp.gt.f32.partialorder %v463, 0.0
  %vm557 = vcmp.gt.f32.partialorder %v465, 0.0
  %vm558 = vcmp.gt.f32.partialorder %v468, 0.0
  %vm559 = vcmp.gt.f32.partialorder %v470, 0.0
  %vm560 = vcmp.gt.f32.partialorder %v473, 0.0
  %vm561 = vcmp.gt.f32.partialorder %v475, 0.0
  %vm562 = vcmp.gt.f32.partialorder %v478, 0.0
  %vm563 = vcmp.gt.f32.partialorder %v480, 0.0
  %vm564 = vcmp.gt.f32.partialorder %v483, 0.0
  %vm565 = vcmp.gt.f32.partialorder %v485, 0.0
  %vm566 = vcmp.gt.f32.partialorder %v488, 0.0
  %vm567 = vcmp.gt.f32.partialorder %v490, 0.0
  %vm568 = vcmp.gt.f32.partialorder %v493, 0.0
  %vm569 = vcmp.gt.f32.partialorder %v495, 0.0
  %vm570 = vcmp.gt.f32.partialorder %v498, 0.0
  %vm571 = vcmp.gt.f32.partialorder %v500, 0.0
  %vm572 = vcmp.gt.f32.partialorder %v503, 0.0
  %vm573 = vcmp.gt.f32.partialorder %v505, 0.0
  %vm574 = vcmp.gt.f32.partialorder %v508, 0.0
  %vm575 = vcmp.gt.f32.partialorder %v510, 0.0
  %v576 = vperm.slane %v80, 1
  %v577 = vmul.f32 %v576, %v353
  %v578 = vmul.f32 %v576, %v355
  %v579 = vmul.f32 %v576, %v358
  %v580 = vmul.f32 %v576, %v360
  %v581 = vmul.f32 %v576, %v363
  %v582 = vmul.f32 %v576, %v365
  %v583 = vmul.f32 %v576, %v368
  %v584 = vmul.f32 %v576, %v370
  %v585 = vmul.f32 %v576, %v373
  %v586 = vmul.f32 %v576, %v375
  %v587 = vmul.f32 %v576, %v378
  %v588 = vmul.f32 %v576, %v380
  %v589 = vmul.f32 %v576, %v383
  %v590 = vmul.f32 %v576, %v385
  %v591 = vmul.f32 %v576, %v388
  %v592 = vmul.f32 %v576, %v390
  %v593 = vmul.f32 %v576, %v393
  %v594 = vmul.f32 %v576, %v395
  %v595 = vmul.f32 %v576, %v398
  %v596 = vmul.f32 %v576, %v400
  %v597 = vmul.f32 %v576, %v403
  %v598 = vmul.f32 %v576, %v405
  %v599 = vmul.f32 %v576, %v408
  %v600 = vmul.f32 %v576, %v410
  %v601 = vmul.f32 %v576, %v413
  %v602 = vmul.f32 %v576, %v415
  %v603 = vmul.f32 %v576, %v418
  %v604 = vmul.f32 %v576, %v420
  %v605 = vmul.f32 %v576, %v423
  %v606 = vmul.f32 %v576, %v425
  %v607 = vmul.f32 %v576, %v428
  %v608 = vmul.f32 %v576, %v430
  %v609 = vmul.f32 %v576, %v433
  %v610 = vmul.f32 %v576, %v435
  %v611 = vmul.f32 %v576, %v438
  %v612 = vmul.f32 %v576, %v440
  %v613 = vmul.f32 %v576, %v443
  %v614 = vmul.f32 %v576, %v445
  %v615 = vmul.f32 %v576, %v448
  %v616 = vmul.f32 %v576, %v450
  %v617 = vmul.f32 %v576, %v453
  %v618 = vmul.f32 %v576, %v455
  %v619 = vmul.f32 %v576, %v458
  %v620 = vmul.f32 %v576, %v460
  %v621 = vmul.f32 %v576, %v463
  %v622 = vmul.f32 %v576, %v465
  %v623 = vmul.f32 %v576, %v468
  %v624 = vmul.f32 %v576, %v470
  %v625 = vmul.f32 %v576, %v473
  %v626 = vmul.f32 %v576, %v475
  %v627 = vmul.f32 %v576, %v478
  %v628 = vmul.f32 %v576, %v480
  %v629 = vmul.f32 %v576, %v483
  %v630 = vmul.f32 %v576, %v485
  %v631 = vmul.f32 %v576, %v488
  %v632 = vmul.f32 %v576, %v490
  %v633 = vmul.f32 %v576, %v493
  %v634 = vmul.f32 %v576, %v495
  %v635 = vmul.f32 %v576, %v498
  %v636 = vmul.f32 %v576, %v500
  %v637 = vmul.f32 %v576, %v503
  %v638 = vmul.f32 %v576, %v505
  %v639 = vmul.f32 %v576, %v508
  %v640 = vmul.f32 %v576, %v510
  %v641 = vsel %vm512, %v353, %v577
  %v642 = vsel %vm513, %v355, %v578
  %v643 = vsel %vm514, %v358, %v579
  %v644 = vsel %vm515, %v360, %v580
  %v645 = vsel %vm516, %v363, %v581
  %v646 = vsel %vm517, %v365, %v582
  %v647 = vsel %vm518, %v368, %v583
  %v648 = vsel %vm519, %v370, %v584
  %v649 = vsel %vm520, %v373, %v585
  %v650 = vsel %vm521, %v375, %v586
  %v651 = vsel %vm522, %v378, %v587
  %v652 = vsel %vm523, %v380, %v588
  %v653 = vsel %vm524, %v383, %v589
  %v654 = vsel %vm525, %v385, %v590
  %v655 = vsel %vm526, %v388, %v591
  %v656 = vsel %vm527, %v390, %v592
  %v657 = vsel %vm528, %v393, %v593
  %v658 = vsel %vm529, %v395, %v594
  %v659 = vsel %vm530, %v398, %v595
  %v660 = vsel %vm531, %v400, %v596
  %v661 = vsel %vm532, %v403, %v597
  %v662 = vsel %vm533, %v405, %v598
  %v663 = vsel %vm534, %v408, %v599
  %v664 = vsel %vm535, %v410, %v600
  %v665 = vsel %vm536, %v413, %v601
  %v666 = vsel %vm537, %v415, %v602
  %v667 = vsel %vm538, %v418, %v603
  %v668 = vsel %vm539, %v420, %v604
  %v669 = vsel %vm540, %v423, %v605
  %v670 = vsel %vm541, %v425, %v606
  %v671 = vsel %vm542, %v428, %v607
  %v672 = vsel %vm543, %v430, %v608
  %v673 = vsel %vm544, %v433, %v609
  %v674 = vsel %vm545, %v435, %v610
  %v675 = vsel %vm546, %v438, %v611
  %v676 = vsel %vm547, %v440, %v612
  %v677 = vsel %vm548, %v443, %v613
  %v678 = vsel %vm549, %v445, %v614
  %v679 = vsel %vm550, %v448, %v615
  %v680 = vsel %vm551, %v450, %v616
  %v681 = vsel %vm552, %v453, %v617
  %v682 = vsel %vm553, %v455, %v618
  %v683 = vsel %vm554, %v458, %v619
  %v684 = vsel %vm555, %v460, %v620
  %v685 = vsel %vm556, %v463, %v621
  %v686 = vsel %vm557, %v465, %v622
  %v687 = vsel %vm558, %v468, %v623
  %v688 = vsel %vm559, %v470, %v624
  %v689 = vsel %vm560, %v473, %v625
  %v690 = vsel %vm561, %v475, %v626
  %v691 = vsel %vm562, %v478, %v627
  %v692 = vsel %vm563, %v480, %v628
  %v693 = vsel %vm564, %v483, %v629
  %v694 = vsel %vm565, %v485, %v630
  %v695 = vsel %vm566, %v488, %v631
  %v696 = vsel %vm567, %v490, %v632
  %v697 = vsel %vm568, %v493, %v633
  %v698 = vsel %vm569, %v495, %v634
  %v699 = vsel %vm570, %v498, %v635
  %v700 = vsel %vm571, %v500, %v636
  %v701 = vsel %vm572, %v503, %v637
  %v702 = vsel %vm573, %v505, %v638
  %v703 = vsel %vm574, %v508, %v639
  %v704 = vsel %vm575, %v510, %v640
  %705 = vst [vmem:[%s3] sm:$0xff] %v641
  %706 = vst [vmem:[%s3 + $0x8] sm:$0xff] %v642
  %707 = vst [vmem:[%s3 + $0x10] sm:$0xff] %v643
  %708 = vst [vmem:[%s3 + $0x18] sm:$0xff] %v644
  %709 = vst [vmem:[%s3 + $0x20] sm:$0xff] %v645
  %710 = vst [vmem:[%s3 + $0x28] sm:$0xff] %v646
  %711 = vst [vmem:[%s3 + $0x30] sm:$0xff] %v647
  %712 = vst [vmem:[%s3 + $0x38] sm:$0xff] %v648
  %713 = vst [vmem:[%s3 + $0x40] sm:$0xff] %v649
  %714 = vst [vmem:[%s3 + $0x48] sm:$0xff] %v650
  %715 = vst [vmem:[%s3 + $0x50] sm:$0xff] %v651
  %716 = vst [vmem:[%s3 + $0x58] sm:$0xff] %v652
  %717 = vst [vmem:[%s3 + $0x60] sm:$0xff] %v653
  %718 = vst [vmem:[%s3 + $0x68] sm:$0xff] %v654
  %719 = vst [vmem:[%s3 + $0x70] sm:$0xff] %v655
  %720 = vst [vmem:[%s3 + $0x78] sm:$0xff] %v656
  %721 = vst [vmem:[%s3 + $0x80] sm:$0xff] %v657
  %722 = vst [vmem:[%s3 + $0x88] sm:$0xff] %v658
  %723 = vst [vmem:[%s3 + $0x90] sm:$0xff] %v659
  %724 = vst [vmem:[%s3 + $0x98] sm:$0xff] %v660
  %725 = vst [vmem:[%s3 + $0xa0] sm:$0xff] %v661
  %726 = vst [vmem:[%s3 + $0xa8] sm:$0xff] %v662
  %727 = vst [vmem:[%s3 + $0xb0] sm:$0xff] %v663
  %728 = vst [vmem:[%s3 + $0xb8] sm:$0xff] %v664
  %729 = vst [vmem:[%s3 + $0xc0] sm:$0xff] %v665
  %730 = vst [vmem:[%s3 + $0xc8] sm:$0xff] %v666
  %731 = vst [vmem:[%s3 + $0xd0] sm:$0xff] %v667
  %732 = vst [vmem:[%s3 + $0xd8] sm:$0xff] %v668
  %733 = vst [vmem:[%s3 + $0xe0] sm:$0xff] %v669
  %734 = vst [vmem:[%s3 + $0xe8] sm:$0xff] %v670
  %735 = vst [vmem:[%s3 + $0xf0] sm:$0xff] %v671
  %736 = vst [vmem:[%s3 + $0xf8] sm:$0xff] %v672
  %737 = vst [vmem:[%s3 + $0x100] sm:$0xff] %v673
  %738 = vst [vmem:[%s3 + $0x108] sm:$0xff] %v674
  %739 = vst [vmem:[%s3 + $0x110] sm:$0xff] %v675
  %740 = vst [vmem:[%s3 + $0x118] sm:$0xff] %v676
  %741 = vst [vmem:[%s3 + $0x120] sm:$0xff] %v677
  %742 = vst [vmem:[%s3 + $0x128] sm:$0xff] %v678
  %743 = vst [vmem:[%s3 + $0x130] sm:$0xff] %v679
  %744 = vst [vmem:[%s3 + $0x138] sm:$0xff] %v680
  %745 = vst [vmem:[%s3 + $0x140] sm:$0xff] %v681
  %746 = vst [vmem:[%s3 + $0x148] sm:$0xff] %v682
  %747 = vst [vmem:[%s3 + $0x150] sm:$0xff] %v683
  %748 = vst [vmem:[%s3 + $0x158] sm:$0xff] %v684
  %749 = vst [vmem:[%s3 + $0x160] sm:$0xff] %v685
  %750 = vst [vmem:[%s3 + $0x168] sm:$0xff] %v686
  %751 = vst [vmem:[%s3 + $0x170] sm:$0xff] %v687
  %752 = vst [vmem:[%s3 + $0x178] sm:$0xff] %v688
  %753 = vst [vmem:[%s3 + $0x180] sm:$0xff] %v689
  %754 = vst [vmem:[%s3 + $0x188] sm:$0xff] %v690
  %755 = vst [vmem:[%s3 + $0x190] sm:$0xff] %v691
  %756 = vst [vmem:[%s3 + $0x198] sm:$0xff] %v692
  %757 = vst [vmem:[%s3 + $0x1a0] sm:$0xff] %v693
  %758 = vst [vmem:[%s3 + $0x1a8] sm:$0xff] %v694
  %759 = vst [vmem:[%s3 + $0x1b0] sm:$0xff] %v695
  %760 = vst [vmem:[%s3 + $0x1b8] sm:$0xff] %v696
  %761 = vst [vmem:[%s3 + $0x1c0] sm:$0xff] %v697
  %762 = vst [vmem:[%s3 + $0x1c8] sm:$0xff] %v698
  %763 = vst [vmem:[%s3 + $0x1d0] sm:$0xff] %v699
  %764 = vst [vmem:[%s3 + $0x1d8] sm:$0xff] %v700
  %765 = vst [vmem:[%s3 + $0x1e0] sm:$0xff] %v701
  %766 = vst [vmem:[%s3 + $0x1e8] sm:$0xff] %v702
  %767 = vst [vmem:[%s3 + $0x1f0] sm:$0xff] %v703
  %768 = vst [vmem:[%s3 + $0x1f8] sm:$0xff] %v704
  // Predicated region
  $region14: #{conv_block_forward.1} parent=0 // pred_check
    _
  $region15: #{conv_block_forward.1} parent=0 // pred_check_branch
    %770 = sbr.rel (0) target = $region17
  $region16: #{conv_block_forward.1} parent=0 // pred_region
    _
  $region17: #{conv_block_forward.1} parent=0 // pred_fallthru
    _
  // Predicated region
  $region18: #{conv_block_forward.1} parent=0 // pred_check
    _
  $region19: #{conv_block_forward.1} parent=0 // pred_check_branch
    %772 = sbr.rel (0) target = $region21
  $region20: #{conv_block_forward.1} parent=0 // pred_region
    _
  $region21: #{conv_block_forward.1} parent=0 // pred_fallthru
    _

</llo_original>
